<compile_context>
chip_gen: v7x
topology: tpu7x:2x2x1
jax: 0.10.0
libtpu: 0.0.40
codegen_flags: <defaults>
</compile_context>

<pallas_src>
import functools

import jax
import jax.numpy as jnp
import numpy as np
from jax import lax
from jax.experimental import pallas as pl
from jax.experimental.pallas import tpu as pltpu

_VMEM_LIMIT_BYTES = 32 * 1024 * 1024   # >= default scoped limit, <= physical on all gens
_TILE_BUDGET_BYTES = 12 * 1024 * 1024  # per-tile (double-buffered) working-set budget


def _gamma_and_cbs(H, W, drop_prob, block_size, gamma_scale):
    cbs = min(block_size, min(W, H))
    # Guard: torch's denominator goes <= 0 when W or H < block_size.
    denom = max((W - block_size + 1) * (H - block_size + 1), 1)
    gamma = gamma_scale * drop_prob * (W * H) / (cbs * cbs) / denom
    return float(gamma), cbs


def _window_kron_matrix(H, W, cbs):
    """K[h*W+t, i*W+j] = 1 iff input (h, t) lies inside the cbs x cbs max-pool
    window of output (i, j) (stride 1, padding cbs//2).  Matches F.max_pool2d
    for odd cbs (the even case is ill-defined in the torch reference)."""
    pad = cbs // 2
    hi = jnp.arange(H)
    wi = jnp.arange(W)
    band_h = (hi[:, None] >= hi[None, :] - pad) & (hi[:, None] <= hi[None, :] + (cbs - 1 - pad))
    band_w = (wi[:, None] >= wi[None, :] - pad) & (wi[:, None] <= wi[None, :] + (cbs - 1 - pad))
    k4 = band_h[:, None, :, None] & band_w[None, :, None, :]       # [h, t, i, j]
    return k4.reshape(H * W, H * W).astype(jnp.bfloat16)           # counts <= cbs^2: exact


def _pick_tile_bc(bc, hw, x_itemsize):
    """Largest divisor of bc that fits the VMEM budget; prefer multiples of 16
    (bf16 sublane packing), then 8.  A full-dim block is always legal."""
    khw_bytes = hw * hw * 2
    per_bc = hw * (2 * 2 + 2 * x_itemsize + 2 * x_itemsize + 8)  # seeds/x/out dbl-buf + f32 temps
    cap = (_TILE_BUDGET_BYTES - khw_bytes) // per_bc
    cap = max(1, min(bc, int(cap)))
    for align in (16, 8):
        for d in range(cap, 0, -1):
            if bc % d == 0 and d % align == 0:
                return d
    return bc


# ----------------------------- kernels ---------------------------------------

def _mask_sum_kernel(seeds_ref, k_ref, sum_ref):
    """Pass 1: count the kept elements of this B*C tile and accumulate into the
    resident (1,1) total (reduction grid axis -> 'arbitrary')."""
    @pl.when(pl.program_id(0) == 0)
    def _init():
        sum_ref[...] = jnp.zeros_like(sum_ref)

    # Window count of the Bernoulli drop seeds; seeds are {0,1}, so count > 0
    # is exactly max_pool2d(seeds) and keep = 1 - max_pool2d(seeds).
    cnt = jnp.dot(seeds_ref[...], k_ref[...], preferred_element_type=jnp.float32)
    keep = (cnt < 0.5).astype(jnp.float32)
    sum_ref[...] = sum_ref[...] + jnp.sum(keep)


def _apply_kernel(seeds_ref, k_ref, x_ref, norm_ref, o_ref):
    """Pass 2: recompute the keep mask for this tile (cheaper than an HBM
    round-trip of the mask) and store x * keep * norm, lane-dense over H*W."""
    cnt = jnp.dot(seeds_ref[...], k_ref[...], preferred_element_type=jnp.float32)
    keep = (cnt < 0.5).astype(jnp.float32)
    scale = norm_ref[0]                                   # scalar from SMEM
    o_ref[...] = (x_ref[...].astype(jnp.float32) * keep * scale).astype(o_ref.dtype)


# ----------------------------- wrapper ----------------------------------------

@functools.partial(jax.jit, static_argnums=(2, 3, 4))
def _drop_block_fast_2d_impl(x, key, drop_prob, block_size, gamma_scale):
    B, C, H, W = x.shape
    BC, HW = B * C, H * W
    gamma, cbs = _gamma_and_cbs(H, W, drop_prob, block_size, gamma_scale)

    # Bernoulli(gamma) drop seeds, {0,1} in bf16 (exact, feeds the bf16 MXU).
    seeds = jax.random.bernoulli(key, gamma, (BC, HW)).astype(jnp.bfloat16)
    kmat = _window_kron_matrix(H, W, cbs)

    tile_bc = _pick_tile_bc(BC, HW, x.dtype.itemsize)
    nt = BC // tile_bc
    x2d = x.reshape(BC, HW)

    # ---- pass 1: global keep-mask count -------------------------------------
    keep_sum = pl.pallas_call(
        _mask_sum_kernel,
        out_shape=jax.ShapeDtypeStruct((1, 1), jnp.float32),
        grid=(nt,),
        in_specs=[
            pl.BlockSpec((tile_bc, HW), lambda i: (i, 0)),
            pl.BlockSpec((HW, HW), lambda i: (0, 0)),      # constant block: fetched once
        ],
        out_specs=pl.BlockSpec((1, 1), lambda i: (0, 0)),  # accumulator across the grid
        compiler_params=pltpu.CompilerParams(
            dimension_semantics=("arbitrary",),
            vmem_limit_bytes=_VMEM_LIMIT_BYTES),
    )(seeds, kmat)

    norm = (jnp.float32(BC * HW) / (keep_sum[0, 0] + jnp.float32(1e-6))).reshape(1)

    # ---- pass 2: normalize + apply -------------------------------------------
    out2d = pl.pallas_call(
        _apply_kernel,
        out_shape=jax.ShapeDtypeStruct((BC, HW), x.dtype),
        grid=(nt,),
        in_specs=[
            pl.BlockSpec((tile_bc, HW), lambda i: (i, 0)),          # seeds
            pl.BlockSpec((HW, HW), lambda i: (0, 0)),               # K (fetched once)
            pl.BlockSpec((tile_bc, HW), lambda i: (i, 0)),          # x (double-buffered)
            pl.BlockSpec(memory_space=pltpu.MemorySpace.SMEM),      # norm scalar
        ],
        out_specs=pl.BlockSpec((tile_bc, HW), lambda i: (i, 0)),
        input_output_aliases={2: 0},   # write in place over x (memory-bound kernel)
        compiler_params=pltpu.CompilerParams(
            dimension_semantics=("parallel",),   # v7x: shard tiles over both TCs
            vmem_limit_bytes=_VMEM_LIMIT_BYTES),
        cost_estimate=pl.CostEstimate(
            flops=2 * BC * HW * HW,
            transcendentals=0,
            bytes_accessed=BC * HW * (2 + 2 * x.dtype.itemsize) + HW * HW * 2),
    )(seeds, kmat, x2d, norm)

    return out2d.reshape(B, C, H, W)


def drop_block_fast_2d_pallas(x, drop_prob=0.1, block_size=7, gamma_scale=1.0, key=None):
    if key is None:
        key = jax.random.PRNGKey(0)
    return _drop_block_fast_2d_impl(x, key, float(drop_prob), int(block_size),
                                    float(gamma_scale))


class DropBlock2d:
    """Pallas-TPU port of the PyTorch DropBlock2d module (fast path)."""

    def __init__(self, drop_prob=0.1, block_size=7, gamma_scale=1.0,
                 with_noise=False, inplace=False, batchwise=False, fast=True):
        self.drop_prob = drop_prob
        self.gamma_scale = gamma_scale
        self.block_size = block_size
        self.with_noise = with_noise
        self.inplace = inplace
        self.batchwise = batchwise
        self.fast = fast

    def __call__(self, x, *, key=None, training=True):
        if not training or not self.drop_prob:
            return x
        # TODO(synk): only the default fast=True / with_noise=False path is a
        # Pallas kernel; `inplace` is realised via input_output_aliases when
        # the caller donates x.
        return drop_block_fast_2d_pallas(
            x, self.drop_prob, self.block_size, self.gamma_scale, key=key)


# ----------------------------- pure-JAX reference -----------------------------

def _drop_block_fast_2d_ref(x, key, drop_prob, block_size, gamma_scale):
    """Mirrors torch drop_block_fast_2d (same Bernoulli seeds as the Pallas path)."""
    B, C, H, W = x.shape
    gamma, cbs = _gamma_and_cbs(H, W, drop_prob, block_size, gamma_scale)
    pad = cbs // 2
    seeds = jax.random.bernoulli(key, gamma, (B * C, H * W)).astype(jnp.bfloat16)
    s = seeds.astype(jnp.float32).reshape(B, C, H, W)
    pooled = lax.reduce_window(
        s, 0.0, lax.max, (1, 1, cbs, cbs), (1, 1, 1, 1),
        [(0, 0), (0, 0), (pad, cbs - 1 - pad), (pad, cbs - 1 - pad)])
    keep = 1.0 - pooled
    norm = keep.size / (jnp.sum(keep) + 1e-6)
    return (x.astype(jnp.float32) * keep * norm).astype(x.dtype)


if __name__ == "__main__":
    data_key, drop_key = jax.random.split(jax.random.PRNGKey(0))
    x = jax.random.normal(data_key, (2, 4, 16, 16), dtype=jnp.float32)

    mod = DropBlock2d(drop_prob=0.1, block_size=7)
    y = mod(x, key=drop_key, training=True)
    y = jax.block_until_ready(y)

    assert y.shape == x.shape and y.dtype == x.dtype
    # eval mode / drop_prob=0 returns the input untouched
    assert mod(x, training=False) is x

    # numerical check against a pure-JAX reference using identical seeds
    y_ref = _drop_block_fast_2d_ref(x, drop_key, 0.1, 7, 1.0)
    np.testing.assert_allclose(np.asarray(y), np.asarray(y_ref), rtol=1e-5, atol=1e-5)

    print("KERNEL_OK")
</pallas_src>

<mosaic_0001>
module attributes {stable_mosaic.version = 11 : i64} {
  func.func @_apply_kernel(%arg0: i32, %arg1: memref<8x256xbf16, #tpu.memory_space<vmem>>, %arg2: memref<256x256xbf16, #tpu.memory_space<vmem>>, %arg3: memref<8x256xf32, #tpu.memory_space<vmem>>, %arg4: memref<1xf32, #tpu.memory_space<smem>>, %arg5: memref<8x256xf32, #tpu.memory_space<vmem>>) attributes {dimension_semantics = [#tpu.dimension_semantics<parallel>], iteration_bounds = array<i64: 1>, scalar_prefetch = 0 : i64, scratch_operands = 0 : i64, tpu.core_type = #tpu.core_type<tc>, window_params = [{transform_indices = @transform_0, window_bounds = array<i64: 8, 256>}, {pipeline_mode = #tpu.pipeline_mode<synchronous>, transform_indices = @transform_1, window_bounds = array<i64: 256, 256>}, {transform_indices = @transform_2, window_bounds = array<i64: 8, 256>}, {transform_indices = @transform_3, window_bounds = array<i64: 1>}, {transform_indices = @transform_4, window_bounds = array<i64: 8, 256>}]} {
    %c0 = arith.constant 0 : index
    %c0_0 = arith.constant 0 : index
    %0 = vector.load %arg1[%c0, %c0_0] : memref<8x256xbf16, #tpu.memory_space<vmem>>, vector<8x256xbf16>
    %c0_1 = arith.constant 0 : index
    %c0_2 = arith.constant 0 : index
    %1 = vector.load %arg2[%c0_1, %c0_2] : memref<256x256xbf16, #tpu.memory_space<vmem>>, vector<256x256xbf16>
    %cst = arith.constant dense<0.000000e+00> : vector<8x256xf32>
    %2 = tpu.matmul %0, %1, %cst {dimension_numbers = #tpu.dot_dimension_numbers<[1], [0], [0], [1], [0, 0, 1, 1], [], []>} : vector<8x256xbf16>, vector<256x256xbf16>, vector<8x256xf32> -> vector<8x256xf32>
    %cst_3 = arith.constant 5.000000e-01 : f32
    %3 = vector.broadcast %cst_3 : f32 to vector<8x256xf32>
    %4 = arith.cmpf olt, %2, %3 : vector<8x256xf32>
    %5 = arith.extui %4 : vector<8x256xi1> to vector<8x256xi32>
    %6 = arith.sitofp %5 : vector<8x256xi32> to vector<8x256xf32>
    %c0_4 = arith.constant 0 : index
    %7 = memref.load %arg4[%c0_4] : memref<1xf32, #tpu.memory_space<smem>>
    %c0_5 = arith.constant 0 : index
    %c0_6 = arith.constant 0 : index
    %8 = vector.load %arg3[%c0_5, %c0_6] : memref<8x256xf32, #tpu.memory_space<vmem>>, vector<8x256xf32>
    %9 = arith.mulf %8, %6 : vector<8x256xf32>
    %10 = vector.broadcast %7 : f32 to vector<8x256xf32>
    %11 = arith.mulf %9, %10 : vector<8x256xf32>
    %c0_7 = arith.constant 0 : index
    %c0_8 = arith.constant 0 : index
    %12 = vector.load %arg5[%c0_7, %c0_8] : memref<8x256xf32, #tpu.memory_space<vmem>>, vector<8x256xf32>
    tpu.vector_store %arg5[%c0_7, %c0_8], %11 {strides = array<i32>} : memref<8x256xf32, #tpu.memory_space<vmem>>, vector<8x256xf32>,
    return
  }
  func.func @transform_0(%arg0: i32) -> (i32, i32) {
    %c0_i32 = arith.constant 0 : i32
    %c0_i32_0 = arith.constant 0 : i32
    return %arg0, %c0_i32 : i32, i32
  }
  func.func @transform_1(%arg0: i32) -> (i32, i32) {
    %c0_i32 = arith.constant 0 : i32
    %c0_i32_0 = arith.constant 0 : i32
    %c0_i32_1 = arith.constant 0 : i32
    return %c0_i32, %c0_i32_0 : i32, i32
  }
  func.func @transform_2(%arg0: i32) -> (i32, i32) {
    %c0_i32 = arith.constant 0 : i32
    %c0_i32_0 = arith.constant 0 : i32
    return %arg0, %c0_i32 : i32, i32
  }
  func.func @transform_3(%arg0: i32) -> i32 {
    %c0_i32 = arith.constant 0 : i32
    %c0_i32_0 = arith.constant 0 : i32
    return %c0_i32 : i32
  }
  func.func @transform_4(%arg0: i32) -> (i32, i32) {
    %c0_i32 = arith.constant 0 : i32
    %c0_i32_0 = arith.constant 0 : i32
    return %arg0, %c0_i32 : i32, i32
  }
}

module attributes {stable_mosaic.version = 11 : i64} {
  func.func @_mask_sum_kernel(%arg0: i32, %arg1: memref<8x256xbf16, #tpu.memory_space<vmem>>, %arg2: memref<256x256xbf16, #tpu.memory_space<vmem>>, %arg3: memref<1x1xf32, #tpu.memory_space<vmem>>) attributes {dimension_semantics = [#tpu.dimension_semantics<arbitrary>], iteration_bounds = array<i64: 1>, scalar_prefetch = 0 : i64, scratch_operands = 0 : i64, tpu.core_type = #tpu.core_type<tc>, window_params = [{transform_indices = @transform_0, window_bounds = array<i64: 8, 256>}, {pipeline_mode = #tpu.pipeline_mode<synchronous>, transform_indices = @transform_1, window_bounds = array<i64: 256, 256>}, {pipeline_mode = #tpu.pipeline_mode<synchronous>, transform_indices = @transform_2, window_bounds = array<i64: 1, 1>}]} {
    %c0_i32 = arith.constant 0 : i32
    %0 = arith.cmpi eq, %arg0, %c0_i32 : i32
    %1 = arith.extui %0 : i1 to i32
    %c0_i32_0 = arith.constant 0 : i32
    %2 = arith.cmpi ne, %1, %c0_i32_0 : i32
    scf.if %2 {
      %cst_10 = arith.constant 0.000000e+00 : f32
      %18 = vector.broadcast %cst_10 : f32 to vector<1x1xf32>
      %c0_11 = arith.constant 0 : index
      %c0_12 = arith.constant 0 : index
      %19 = vector.load %arg3[%c0_11, %c0_12] : memref<1x1xf32, #tpu.memory_space<vmem>>, vector<1x1xf32>
      tpu.vector_store %arg3[%c0_11, %c0_12], %18 {strides = array<i32>} : memref<1x1xf32, #tpu.memory_space<vmem>>, vector<1x1xf32>,
    } else {
    }
    %c0 = arith.constant 0 : index
    %c0_1 = arith.constant 0 : index
    %3 = vector.load %arg1[%c0, %c0_1] : memref<8x256xbf16, #tpu.memory_space<vmem>>, vector<8x256xbf16>
    %c0_2 = arith.constant 0 : index
    %c0_3 = arith.constant 0 : index
    %4 = vector.load %arg2[%c0_2, %c0_3] : memref<256x256xbf16, #tpu.memory_space<vmem>>, vector<256x256xbf16>
    %cst = arith.constant dense<0.000000e+00> : vector<8x256xf32>
    %5 = tpu.matmul %3, %4, %cst {dimension_numbers = #tpu.dot_dimension_numbers<[1], [0], [0], [1], [0, 0, 1, 1], [], []>} : vector<8x256xbf16>, vector<256x256xbf16>, vector<8x256xf32> -> vector<8x256xf32>
    %cst_4 = arith.constant 5.000000e-01 : f32
    %6 = vector.broadcast %cst_4 : f32 to vector<8x256xf32>
    %7 = arith.cmpf olt, %5, %6 : vector<8x256xf32>
    %8 = arith.extui %7 : vector<8x256xi1> to vector<8x256xi32>
    %9 = arith.sitofp %8 : vector<8x256xi32> to vector<8x256xf32>
    %c0_5 = arith.constant 0 : index
    %c0_6 = arith.constant 0 : index
    %10 = vector.load %arg3[%c0_5, %c0_6] : memref<1x1xf32, #tpu.memory_space<vmem>>, vector<1x1xf32>
    %11 = vector.shape_cast %9 : vector<8x256xf32> to vector<1x8x256xf32>
    %cst_7 = arith.constant dense<0.000000e+00> : vector<1xf32>
    %12 = vector.multi_reduction <add>, %11, %cst_7 [1, 2] : vector<1x8x256xf32> to vector<1xf32>
    %13 = vector.shape_cast %12 : vector<1xf32> to vector<1x1x1xf32>
    %14 = vector.extract %13[0, 0, 0] : f32 from vector<1x1x1xf32>
    %15 = vector.broadcast %14 : f32 to vector<1x1xf32>
    %16 = arith.addf %10, %15 : vector<1x1xf32>
    %c0_8 = arith.constant 0 : index
    %c0_9 = arith.constant 0 : index
    %17 = vector.load %arg3[%c0_8, %c0_9] : memref<1x1xf32, #tpu.memory_space<vmem>>, vector<1x1xf32>
    tpu.vector_store %arg3[%c0_8, %c0_9], %16 {strides = array<i32>} : memref<1x1xf32, #tpu.memory_space<vmem>>, vector<1x1xf32>,
    return
  }
  func.func @transform_0(%arg0: i32) -> (i32, i32) {
    %c0_i32 = arith.constant 0 : i32
    %c0_i32_0 = arith.constant 0 : i32
    return %arg0, %c0_i32 : i32, i32
  }
  func.func @transform_1(%arg0: i32) -> (i32, i32) {
    %c0_i32 = arith.constant 0 : i32
    %c0_i32_0 = arith.constant 0 : i32
    %c0_i32_1 = arith.constant 0 : i32
    return %c0_i32, %c0_i32_0 : i32, i32
  }
  func.func @transform_2(%arg0: i32) -> (i32, i32) {
    %c0_i32 = arith.constant 0 : i32
    %c0_i32_0 = arith.constant 0 : i32
    %c0_i32_1 = arith.constant 0 : i32
    return %c0_i32, %c0_i32_0 : i32, i32
  }
}

</mosaic_0001>

<llo_original>
// kernel: _drop_block_fast_2d_impl.3
$region0: #{_drop_block_fast_2d_impl.3}
  #allocation0 [shape = 'u32[]', space=smem, size = 0x4, offset = 0x4, fixed_abs, tag = 'smem constant byte address 0x4 - core index']
  #allocation1 [shape = 'u32[144,128]{1,0:T(1,128)}', space=vmem, size = 0x12000, scoped, tag = 'internal scratch']
  #allocation2 [shape = 'f32[1]{0:T(128)S(6)}', space=smem, size = 0x200, scoped, tag = 'scoped memory for _drop_block_fast_2d_impl.3']
  %s0 = inlined_call_operand.vmem [shape: bf16[8,256], index: 0, kind: input, shape index: {}]
  %s1 = inlined_call_operand.vmem [shape: bf16[256,256], index: 1, kind: input, shape index: {}]
  %s2 = inlined_call_operand.vmem [shape: f32[8,256], index: 2, kind: input, shape index: {}, may-alias: {2,4}]
  %s3 = inlined_call_operand.<no memory space> [shape: f32[1], index: 3, kind: input, shape index: {}]
  %s4 = inlined_call_operand.vmem [shape: f32[8,256], index: 4, kind: output, shape index: {}, may-alias: {2,4}]
  %s5 = sld [smem:[#allocation0]]
  $region26: #{_drop_block_fast_2d_impl.3} parent=0
    _
  %s7 = ssub.s32 1, %s5
  %s8 = scalar_select 0, %s7, %s5
  %9 = sst [smem:[#allocation2]] %s3
  // Predicated region
  $region2: #{_drop_block_fast_2d_impl.3} parent=0 // pred_check
    _
  $region3: #{_drop_block_fast_2d_impl.3} parent=0 // pred_check_branch
    %11 = sbr.rel (0) target = $region5
  $region4: #{_drop_block_fast_2d_impl.3} parent=0 // pred_region
    _
  $region5: #{_drop_block_fast_2d_impl.3} parent=0 // pred_fallthru
    _
  // Predicated region
  $region6: #{_drop_block_fast_2d_impl.3} parent=0 // pred_check
    _
  $region7: #{_drop_block_fast_2d_impl.3} parent=0 // pred_check_branch
    %13 = sbr.rel (0) target = $region9
  $region8: #{_drop_block_fast_2d_impl.3} parent=0 // pred_region
    _
  $region9: #{_drop_block_fast_2d_impl.3} parent=0 // pred_fallthru
    _
  // Predicated region
  $region10: #{_drop_block_fast_2d_impl.3} parent=0 // pred_check
    _
  $region11: #{_drop_block_fast_2d_impl.3} parent=0 // pred_check_branch
    %15 = sbr.rel (0) target = $region13
  $region12: #{_drop_block_fast_2d_impl.3} parent=0 // pred_region
    _
  $region13: #{_drop_block_fast_2d_impl.3} parent=0 // pred_fallthru
    _
  // Predicated region
  $region14: #{_drop_block_fast_2d_impl.3} parent=0 // pred_check
    _
  $region15: #{_drop_block_fast_2d_impl.3} parent=0 // pred_check_branch
    %17 = sbr.rel (0) target = $region17
  $region16: #{_drop_block_fast_2d_impl.3} parent=0 // pred_region
    _
  $region17: #{_drop_block_fast_2d_impl.3} parent=0 // pred_fallthru
    _
  %v18 = vld [vmem:[%s0] sm:$0xff]
  %v19 = vld [vmem:[%s1] sm:$0xff]
  %v20 = vld [vmem:[%s1 + $0x8] sm:$0xff]
  %v21 = vld [vmem:[%s1 + $0x10] sm:$0xff]
  %v22 = vld [vmem:[%s1 + $0x18] sm:$0xff]
  %v23 = vld [vmem:[%s1 + $0x20] sm:$0xff]
  %v24 = vld [vmem:[%s1 + $0x28] sm:$0xff]
  %v25 = vld [vmem:[%s1 + $0x30] sm:$0xff]
  %v26 = vld [vmem:[%s1 + $0x38] sm:$0xff]
  %v27 = vld [vmem:[%s1 + $0x40] sm:$0xff]
  %v28 = vld [vmem:[%s1 + $0x48] sm:$0xff]
  %v29 = vld [vmem:[%s1 + $0x50] sm:$0xff]
  %v30 = vld [vmem:[%s1 + $0x58] sm:$0xff]
  %v31 = vld [vmem:[%s1 + $0x60] sm:$0xff]
  %v32 = vld [vmem:[%s1 + $0x68] sm:$0xff]
  %v33 = vld [vmem:[%s1 + $0x70] sm:$0xff]
  %v34 = vld [vmem:[%s1 + $0x78] sm:$0xff]
  %v35 = vld [vmem:[%s1 + $0x80] sm:$0xff]
  %v36 = vld [vmem:[%s1 + $0x88] sm:$0xff]
  %v37 = vld [vmem:[%s1 + $0x90] sm:$0xff]
  %v38 = vld [vmem:[%s1 + $0x98] sm:$0xff]
  %v39 = vld [vmem:[%s1 + $0xa0] sm:$0xff]
  %v40 = vld [vmem:[%s1 + $0xa8] sm:$0xff]
  %v41 = vld [vmem:[%s1 + $0xb0] sm:$0xff]
  %v42 = vld [vmem:[%s1 + $0xb8] sm:$0xff]
  %v43 = vld [vmem:[%s1 + $0xc0] sm:$0xff]
  %v44 = vld [vmem:[%s1 + $0xc8] sm:$0xff]
  %v45 = vld [vmem:[%s1 + $0xd0] sm:$0xff]
  %v46 = vld [vmem:[%s1 + $0xd8] sm:$0xff]
  %v47 = vld [vmem:[%s1 + $0xe0] sm:$0xff]
  %v48 = vld [vmem:[%s1 + $0xe8] sm:$0xff]
  %v49 = vld [vmem:[%s1 + $0xf0] sm:$0xff]
  %v50 = vld [vmem:[%s1 + $0xf8] sm:$0xff]
  %v52 = vunpack.c.l.b16 %v18
  %v53 = vunpack.c.h.b16 %v18
  %v54 = vpack.c.b16 %v52, %v52
  %v55 = vpack.c.b16 %v53, %v53
  %v90 = vunpack.c.l.b16 %v19
  %v91 = vunpack.c.h.b16 %v19
  %v92 = vunpack.c.l.b16 %v20
  %v93 = vunpack.c.h.b16 %v20
  %v94 = vunpack.c.l.b16 %v21
  %v95 = vunpack.c.h.b16 %v21
  %v96 = vunpack.c.l.b16 %v22
  %v97 = vunpack.c.h.b16 %v22
  %v98 = vunpack.c.l.b16 %v23
  %v99 = vunpack.c.h.b16 %v23
  %v100 = vunpack.c.l.b16 %v24
  %v101 = vunpack.c.h.b16 %v24
  %v102 = vunpack.c.l.b16 %v25
  %v103 = vunpack.c.h.b16 %v25
  %v104 = vunpack.c.l.b16 %v26
  %v105 = vunpack.c.h.b16 %v26
  %v106 = vunpack.c.l.b16 %v27
  %v107 = vunpack.c.h.b16 %v27
  %v108 = vunpack.c.l.b16 %v28
  %v109 = vunpack.c.h.b16 %v28
  %v110 = vunpack.c.l.b16 %v29
  %v111 = vunpack.c.h.b16 %v29
  %v112 = vunpack.c.l.b16 %v30
  %v113 = vunpack.c.h.b16 %v30
  %v114 = vunpack.c.l.b16 %v31
  %v115 = vunpack.c.h.b16 %v31
  %v116 = vunpack.c.l.b16 %v32
  %v117 = vunpack.c.h.b16 %v32
  %v118 = vunpack.c.l.b16 %v33
  %v119 = vunpack.c.h.b16 %v33
  %v120 = vunpack.c.l.b16 %v34
  %v121 = vunpack.c.h.b16 %v34
  %v122 = vunpack.c.l.b16 %v35
  %v123 = vunpack.c.h.b16 %v35
  %v124 = vunpack.c.l.b16 %v36
  %v125 = vunpack.c.h.b16 %v36
  %v126 = vunpack.c.l.b16 %v37
  %v127 = vunpack.c.h.b16 %v37
  %v128 = vunpack.c.l.b16 %v38
  %v129 = vunpack.c.h.b16 %v38
  %v130 = vunpack.c.l.b16 %v39
  %v131 = vunpack.c.h.b16 %v39
  %v132 = vunpack.c.l.b16 %v40
  %v133 = vunpack.c.h.b16 %v40
  %v134 = vunpack.c.l.b16 %v41
  %v135 = vunpack.c.h.b16 %v41
  %v136 = vunpack.c.l.b16 %v42
  %v137 = vunpack.c.h.b16 %v42
  %v138 = vunpack.c.l.b16 %v43
  %v139 = vunpack.c.h.b16 %v43
  %v140 = vunpack.c.l.b16 %v44
  %v141 = vunpack.c.h.b16 %v44
  %v142 = vunpack.c.l.b16 %v45
  %v143 = vunpack.c.h.b16 %v45
  %v144 = vunpack.c.l.b16 %v46
  %v145 = vunpack.c.h.b16 %v46
  %v146 = vunpack.c.l.b16 %v47
  %v147 = vunpack.c.h.b16 %v47
  %v148 = vunpack.c.l.b16 %v48
  %v149 = vunpack.c.h.b16 %v48
  %v150 = vunpack.c.l.b16 %v49
  %v151 = vunpack.c.h.b16 %v49
  %v152 = vunpack.c.l.b16 %v50
  %v153 = vunpack.c.h.b16 %v50
  %v154 = vpack.c.b16 %v92, %v90
  %v155 = vpack.c.b16 %v93, %v91
  %v156 = vpack.c.b16 %v96, %v94
  %v157 = vpack.c.b16 %v97, %v95
  %v158 = vpack.c.b16 %v100, %v98
  %v159 = vpack.c.b16 %v101, %v99
  %v160 = vpack.c.b16 %v104, %v102
  %v161 = vpack.c.b16 %v105, %v103
  %v162 = vpack.c.b16 %v108, %v106
  %v163 = vpack.c.b16 %v109, %v107
  %v164 = vpack.c.b16 %v112, %v110
  %v165 = vpack.c.b16 %v113, %v111
  %v166 = vpack.c.b16 %v116, %v114
  %v167 = vpack.c.b16 %v117, %v115
  %v168 = vpack.c.b16 %v120, %v118
  %v169 = vpack.c.b16 %v121, %v119
  %v170 = vpack.c.b16 %v124, %v122
  %v171 = vpack.c.b16 %v125, %v123
  %v172 = vpack.c.b16 %v128, %v126
  %v173 = vpack.c.b16 %v129, %v127
  %v174 = vpack.c.b16 %v132, %v130
  %v175 = vpack.c.b16 %v133, %v131
  %v176 = vpack.c.b16 %v136, %v134
  %v177 = vpack.c.b16 %v137, %v135
  %v178 = vpack.c.b16 %v140, %v138
  %v179 = vpack.c.b16 %v141, %v139
  %v180 = vpack.c.b16 %v144, %v142
  %v181 = vpack.c.b16 %v145, %v143
  %v182 = vpack.c.b16 %v148, %v146
  %v183 = vpack.c.b16 %v149, %v147
  %v184 = vpack.c.b16 %v152, %v150
  %v185 = vpack.c.b16 %v153, %v151
  %218 = vmatprep.subr.bf16.mxu0 %v155
  %219 = vmatpush1.bf16.msra.mxu0 %v154
  %220 = vmatprep.subr.bf16.mxu0 %v157
  %221 = vmatpush1.bf16.msra.mxu0 %v156
  %222 = vmatprep.subr.bf16.mxu0 %v159
  %223 = vmatpush1.bf16.msra.mxu0 %v158
  %224 = vmatprep.subr.bf16.mxu0 %v161
  %225 = vmatpush1.bf16.msra.mxu0 %v160
  %226 = vmatprep.subr.bf16.mxu0 %v163
  %227 = vmatpush1.bf16.msra.mxu0 %v162
  %228 = vmatprep.subr.bf16.mxu0 %v165
  %229 = vmatpush1.bf16.msra.mxu0 %v164
  %230 = vmatprep.subr.bf16.mxu0 %v167
  %231 = vmatpush1.bf16.msra.mxu0 %v166
  %232 = vmatprep.subr.bf16.mxu0 %v169
  %233 = vmatpush1.bf16.msra.mxu0 %v168
  %234 = vmatprep.subr.bf16.mxu0 %v171
  %235 = vmatpush1.bf16.msra.mxu0 %v170
  %236 = vmatprep.subr.bf16.mxu0 %v173
  %237 = vmatpush1.bf16.msra.mxu0 %v172
  %238 = vmatprep.subr.bf16.mxu0 %v175
  %239 = vmatpush1.bf16.msra.mxu0 %v174
  %240 = vmatprep.subr.bf16.mxu0 %v177
  %241 = vmatpush1.bf16.msra.mxu0 %v176
  %242 = vmatprep.subr.bf16.mxu0 %v179
  %243 = vmatpush1.bf16.msra.mxu0 %v178
  %244 = vmatprep.subr.bf16.mxu0 %v181
  %245 = vmatpush1.bf16.msra.mxu0 %v180
  %246 = vmatprep.subr.bf16.mxu0 %v183
  %247 = vmatpush1.bf16.msra.mxu0 %v182
  %248 = vmatprep.subr.bf16.mxu0 %v185
  %249 = vmatpush1.bf16.msra.mxu0 %v184
  %250 = vmatprep.mubr.bf16.mxu0 %v55
  %251 = vmatmul.mubr.bf16.gmra.mrb[0].mxu0 %v54
  %v252 = vpop.f32.mrb[0].mxu0
  %v253 = vadd.f32 0.0, %v252
  %v254 = vpop.f32.mrb[0].mxu0
  %v255 = vadd.f32 0.0, %v254
  %v256 = vpop.f32.mrb[0].mxu0
  %v257 = vpop.f32.mrb[0].mxu0
  %258 = vdwg.mxu0
  %vm259 = vcmp.lt.f32.partialorder %v253, 0.5
  %vm260 = vcmp.lt.f32.partialorder %v255, 0.5
  %v261 = vsel %vm259, 1, 0
  %v262 = vsel %vm260, 1, 0
  %v263 = vcvt.s32.f32 %v261
  %v264 = vcvt.s32.f32 %v262
  %s265 = sld [smem:[#allocation2]]
  %v266 = vld [vmem:[%s2] sm:$0xff]
  %v267 = vld [vmem:[%s2 + $0x8] sm:$0xff]
  %v268 = vmul.f32 %v266, %v263
  %v269 = vmul.f32 %v267, %v264
  %v270 = vstv %s265
  %v271 = vmul.f32 %v268, %v270
  %v272 = vmul.f32 %v269, %v270
  %273 = vst [vmem:[%s4] sm:$0xff] %v271
  %274 = vst [vmem:[%s4 + $0x8] sm:$0xff] %v272
  // Predicated region
  $region18: #{_drop_block_fast_2d_impl.3} parent=0 // pred_check
    _
  $region19: #{_drop_block_fast_2d_impl.3} parent=0 // pred_check_branch
    %276 = sbr.rel (0) target = $region21
  $region20: #{_drop_block_fast_2d_impl.3} parent=0 // pred_region
    _
  $region21: #{_drop_block_fast_2d_impl.3} parent=0 // pred_fallthru
    _
  // Predicated region
  $region22: #{_drop_block_fast_2d_impl.3} parent=0 // pred_check
    _
  $region23: #{_drop_block_fast_2d_impl.3} parent=0 // pred_check_branch
    %278 = sbr.rel (0) target = $region25
  $region24: #{_drop_block_fast_2d_impl.3} parent=0 // pred_region
    _
  $region25: #{_drop_block_fast_2d_impl.3} parent=0 // pred_fallthru
    _

// kernel: _drop_block_fast_2d_impl.2
$region0: #{_drop_block_fast_2d_impl.2}
  #allocation0 [shape = 'u32[]', space=smem, size = 0x4, offset = 0x4, fixed_abs, tag = 'smem constant byte address 0x4 - core index']
  #allocation1 [shape = 'u32[144,128]{1,0:T(1,128)}', space=vmem, size = 0x12000, scoped, tag = 'internal scratch']
  %s0 = inlined_call_operand.vmem [shape: bf16[8,256], index: 0, kind: input, shape index: {}]
  %s1 = inlined_call_operand.vmem [shape: bf16[256,256], index: 1, kind: input, shape index: {}]
  %s2 = inlined_call_operand.hbm [shape: f32[1,1], index: 2, kind: output, shape index: {}]
  %s3 = sld [smem:[#allocation0]]
  $region22: #{_drop_block_fast_2d_impl.2} parent=0
    _
  %s5 = ssub.s32 1, %s3
  %s6 = scalar_select 0, %s5, %s3
  $region1: #{_drop_block_fast_2d_impl.2} parent=0
    #allocation2 [shape = 'u8[512]{0}', space=vmem, size = 0x400, scoped, tag = 'output window, operand 0, single buffered']
    #allocation3 [shape = 's32[1]{0}', space=sflag, size = 0x4, scoped, tag = 'scoped memory for _drop_block_fast_2d_impl.2']
    %7 = vsyncpa [#allocation3], 0
    // Predicated region
    $region2: #{_drop_block_fast_2d_impl.2} parent=1 // pred_check
      _
    $region3: #{_drop_block_fast_2d_impl.2} parent=1 // pred_check_branch
      %9 = sbr.rel (0) target = $region5
    $region4: #{_drop_block_fast_2d_impl.2} parent=1 // pred_region
      _
    $region5: #{_drop_block_fast_2d_impl.2} parent=1 // pred_fallthru
      _
    // Predicated region
    $region6: #{_drop_block_fast_2d_impl.2} parent=1 // pred_check
      _
    $region7: #{_drop_block_fast_2d_impl.2} parent=1 // pred_check_branch
      %11 = sbr.rel (0) target = $region9
    $region8: #{_drop_block_fast_2d_impl.2} parent=1 // pred_region
      _
    $region9: #{_drop_block_fast_2d_impl.2} parent=1 // pred_fallthru
      _
    %p12 = scmp.eq.s32.totalorder 0, 0
    // Predicated region
    $region10: #{_drop_block_fast_2d_impl.2} parent=1 // pred_check
      %p13 = pneg %p12
    $region11: #{_drop_block_fast_2d_impl.2} parent=1 // pred_check_branch
      %15 = sbr.rel (%p13) target = $region13
    $region12: #{_drop_block_fast_2d_impl.2} parent=1 // pred_region
      %vm16 = vcmask 0
      %17 = vst.msk [vmem:[#allocation2] sm:$0x1] %vm16, 0.0
    $region13: #{_drop_block_fast_2d_impl.2} parent=1 // pred_fallthru
      _
    %v18 = vld [vmem:[%s0] sm:$0xff]
    %v19 = vld [vmem:[%s1] sm:$0xff]
    %v20 = vld [vmem:[%s1 + $0x8] sm:$0xff]
    %v21 = vld [vmem:[%s1 + $0x10] sm:$0xff]
    %v22 = vld [vmem:[%s1 + $0x18] sm:$0xff]
    %v23 = vld [vmem:[%s1 + $0x20] sm:$0xff]
    %v24 = vld [vmem:[%s1 + $0x28] sm:$0xff]
    %v25 = vld [vmem:[%s1 + $0x30] sm:$0xff]
    %v26 = vld [vmem:[%s1 + $0x38] sm:$0xff]
    %v27 = vld [vmem:[%s1 + $0x40] sm:$0xff]
    %v28 = vld [vmem:[%s1 + $0x48] sm:$0xff]
    %v29 = vld [vmem:[%s1 + $0x50] sm:$0xff]
    %v30 = vld [vmem:[%s1 + $0x58] sm:$0xff]
    %v31 = vld [vmem:[%s1 + $0x60] sm:$0xff]
    %v32 = vld [vmem:[%s1 + $0x68] sm:$0xff]
    %v33 = vld [vmem:[%s1 + $0x70] sm:$0xff]
    %v34 = vld [vmem:[%s1 + $0x78] sm:$0xff]
    %v35 = vld [vmem:[%s1 + $0x80] sm:$0xff]
    %v36 = vld [vmem:[%s1 + $0x88] sm:$0xff]
    %v37 = vld [vmem:[%s1 + $0x90] sm:$0xff]
    %v38 = vld [vmem:[%s1 + $0x98] sm:$0xff]
    %v39 = vld [vmem:[%s1 + $0xa0] sm:$0xff]
    %v40 = vld [vmem:[%s1 + $0xa8] sm:$0xff]
    %v41 = vld [vmem:[%s1 + $0xb0] sm:$0xff]
    %v42 = vld [vmem:[%s1 + $0xb8] sm:$0xff]
    %v43 = vld [vmem:[%s1 + $0xc0] sm:$0xff]
    %v44 = vld [vmem:[%s1 + $0xc8] sm:$0xff]
    %v45 = vld [vmem:[%s1 + $0xd0] sm:$0xff]
    %v46 = vld [vmem:[%s1 + $0xd8] sm:$0xff]
    %v47 = vld [vmem:[%s1 + $0xe0] sm:$0xff]
    %v48 = vld [vmem:[%s1 + $0xe8] sm:$0xff]
    %v49 = vld [vmem:[%s1 + $0xf0] sm:$0xff]
    %v50 = vld [vmem:[%s1 + $0xf8] sm:$0xff]
    %v52 = vunpack.c.l.b16 %v18
    %v53 = vunpack.c.h.b16 %v18
    %v54 = vpack.c.b16 %v52, %v52
    %v55 = vpack.c.b16 %v53, %v53
    %v90 = vunpack.c.l.b16 %v19
    %v91 = vunpack.c.h.b16 %v19
    %v92 = vunpack.c.l.b16 %v20
    %v93 = vunpack.c.h.b16 %v20
    %v94 = vunpack.c.l.b16 %v21
    %v95 = vunpack.c.h.b16 %v21
    %v96 = vunpack.c.l.b16 %v22
    %v97 = vunpack.c.h.b16 %v22
    %v98 = vunpack.c.l.b16 %v23
    %v99 = vunpack.c.h.b16 %v23
    %v100 = vunpack.c.l.b16 %v24
    %v101 = vunpack.c.h.b16 %v24
    %v102 = vunpack.c.l.b16 %v25
    %v103 = vunpack.c.h.b16 %v25
    %v104 = vunpack.c.l.b16 %v26
    %v105 = vunpack.c.h.b16 %v26
    %v106 = vunpack.c.l.b16 %v27
    %v107 = vunpack.c.h.b16 %v27
    %v108 = vunpack.c.l.b16 %v28
    %v109 = vunpack.c.h.b16 %v28
    %v110 = vunpack.c.l.b16 %v29
    %v111 = vunpack.c.h.b16 %v29
    %v112 = vunpack.c.l.b16 %v30
    %v113 = vunpack.c.h.b16 %v30
    %v114 = vunpack.c.l.b16 %v31
    %v115 = vunpack.c.h.b16 %v31
    %v116 = vunpack.c.l.b16 %v32
    %v117 = vunpack.c.h.b16 %v32
    %v118 = vunpack.c.l.b16 %v33
    %v119 = vunpack.c.h.b16 %v33
    %v120 = vunpack.c.l.b16 %v34
    %v121 = vunpack.c.h.b16 %v34
    %v122 = vunpack.c.l.b16 %v35
    %v123 = vunpack.c.h.b16 %v35
    %v124 = vunpack.c.l.b16 %v36
    %v125 = vunpack.c.h.b16 %v36
    %v126 = vunpack.c.l.b16 %v37
    %v127 = vunpack.c.h.b16 %v37
    %v128 = vunpack.c.l.b16 %v38
    %v129 = vunpack.c.h.b16 %v38
    %v130 = vunpack.c.l.b16 %v39
    %v131 = vunpack.c.h.b16 %v39
    %v132 = vunpack.c.l.b16 %v40
    %v133 = vunpack.c.h.b16 %v40
    %v134 = vunpack.c.l.b16 %v41
    %v135 = vunpack.c.h.b16 %v41
    %v136 = vunpack.c.l.b16 %v42
    %v137 = vunpack.c.h.b16 %v42
    %v138 = vunpack.c.l.b16 %v43
    %v139 = vunpack.c.h.b16 %v43
    %v140 = vunpack.c.l.b16 %v44
    %v141 = vunpack.c.h.b16 %v44
    %v142 = vunpack.c.l.b16 %v45
    %v143 = vunpack.c.h.b16 %v45
    %v144 = vunpack.c.l.b16 %v46
    %v145 = vunpack.c.h.b16 %v46
    %v146 = vunpack.c.l.b16 %v47
    %v147 = vunpack.c.h.b16 %v47
    %v148 = vunpack.c.l.b16 %v48
    %v149 = vunpack.c.h.b16 %v48
    %v150 = vunpack.c.l.b16 %v49
    %v151 = vunpack.c.h.b16 %v49
    %v152 = vunpack.c.l.b16 %v50
    %v153 = vunpack.c.h.b16 %v50
    %v154 = vpack.c.b16 %v92, %v90
    %v155 = vpack.c.b16 %v93, %v91
    %v156 = vpack.c.b16 %v96, %v94
    %v157 = vpack.c.b16 %v97, %v95
    %v158 = vpack.c.b16 %v100, %v98
    %v159 = vpack.c.b16 %v101, %v99
    %v160 = vpack.c.b16 %v104, %v102
    %v161 = vpack.c.b16 %v105, %v103
    %v162 = vpack.c.b16 %v108, %v106
    %v163 = vpack.c.b16 %v109, %v107
    %v164 = vpack.c.b16 %v112, %v110
    %v165 = vpack.c.b16 %v113, %v111
    %v166 = vpack.c.b16 %v116, %v114
    %v167 = vpack.c.b16 %v117, %v115
    %v168 = vpack.c.b16 %v120, %v118
    %v169 = vpack.c.b16 %v121, %v119
    %v170 = vpack.c.b16 %v124, %v122
    %v171 = vpack.c.b16 %v125, %v123
    %v172 = vpack.c.b16 %v128, %v126
    %v173 = vpack.c.b16 %v129, %v127
    %v174 = vpack.c.b16 %v132, %v130
    %v175 = vpack.c.b16 %v133, %v131
    %v176 = vpack.c.b16 %v136, %v134
    %v177 = vpack.c.b16 %v137, %v135
    %v178 = vpack.c.b16 %v140, %v138
    %v179 = vpack.c.b16 %v141, %v139
    %v180 = vpack.c.b16 %v144, %v142
    %v181 = vpack.c.b16 %v145, %v143
    %v182 = vpack.c.b16 %v148, %v146
    %v183 = vpack.c.b16 %v149, %v147
    %v184 = vpack.c.b16 %v152, %v150
    %v185 = vpack.c.b16 %v153, %v151
    %218 = vmatprep.subr.bf16.mxu0 %v155
    %219 = vmatpush1.bf16.msra.mxu0 %v154
    %220 = vmatprep.subr.bf16.mxu0 %v157
    %221 = vmatpush1.bf16.msra.mxu0 %v156
    %222 = vmatprep.subr.bf16.mxu0 %v159
    %223 = vmatpush1.bf16.msra.mxu0 %v158
    %224 = vmatprep.subr.bf16.mxu0 %v161
    %225 = vmatpush1.bf16.msra.mxu0 %v160
    %226 = vmatprep.subr.bf16.mxu0 %v163
    %227 = vmatpush1.bf16.msra.mxu0 %v162
    %228 = vmatprep.subr.bf16.mxu0 %v165
    %229 = vmatpush1.bf16.msra.mxu0 %v164
    %230 = vmatprep.subr.bf16.mxu0 %v167
    %231 = vmatpush1.bf16.msra.mxu0 %v166
    %232 = vmatprep.subr.bf16.mxu0 %v169
    %233 = vmatpush1.bf16.msra.mxu0 %v168
    %234 = vmatprep.subr.bf16.mxu0 %v171
    %235 = vmatpush1.bf16.msra.mxu0 %v170
    %236 = vmatprep.subr.bf16.mxu0 %v173
    %237 = vmatpush1.bf16.msra.mxu0 %v172
    %238 = vmatprep.subr.bf16.mxu0 %v175
    %239 = vmatpush1.bf16.msra.mxu0 %v174
    %240 = vmatprep.subr.bf16.mxu0 %v177
    %241 = vmatpush1.bf16.msra.mxu0 %v176
    %242 = vmatprep.subr.bf16.mxu0 %v179
    %243 = vmatpush1.bf16.msra.mxu0 %v178
    %244 = vmatprep.subr.bf16.mxu0 %v181
    %245 = vmatpush1.bf16.msra.mxu0 %v180
    %246 = vmatprep.subr.bf16.mxu0 %v183
    %247 = vmatpush1.bf16.msra.mxu0 %v182
    %248 = vmatprep.subr.bf16.mxu0 %v185
    %249 = vmatpush1.bf16.msra.mxu0 %v184
    %250 = vmatprep.mubr.bf16.mxu0 %v55
    %251 = vmatmul.mubr.bf16.gmra.mrb[0].mxu0 %v54
    %v252 = vpop.f32.mrb[0].mxu0
    %v253 = vadd.f32 0.0, %v252
    %v254 = vpop.f32.mrb[0].mxu0
    %v255 = vadd.f32 0.0, %v254
    %v256 = vpop.f32.mrb[0].mxu0
    %v257 = vpop.f32.mrb[0].mxu0
    %258 = vdwg.mxu0
    %vm259 = vcmp.lt.f32.partialorder %v253, 0.5
    %vm260 = vcmp.lt.f32.partialorder %v255, 0.5
    %v261 = vsel %vm259, 1, 0
    %v262 = vsel %vm260, 1, 0
    %v263 = vcvt.s32.f32 %v261
    %v264 = vcvt.s32.f32 %v262
    %v265 = vld [vmem:[#allocation2] sm:$0x1]
    %v266 = vadd.f32 %v263, %v264
    %267 = vadd.xlane.f32.xlu0 %v266
    %v268 = vpop.xlane.xlu0 %267
    %v269 = vrot.slane %v268, 4
    %v270 = vadd.f32 %v268, %v269
    %v271 = vrot.slane %v270, 2
    %v272 = vadd.f32 %v270, %v271
    %v273 = vrot.slane %v272, 1
    %v274 = vadd.f32 %v272, %v273
    %s275 = vtos %v274
    %v276 = vstv %s275
    %v277 = vadd.f32 %v265, %v276
    %vm278 = vcmask 0
    %279 = vst.msk [vmem:[#allocation2] sm:$0x1] %vm278, %v277
    // Predicated region
    $region14: #{_drop_block_fast_2d_impl.2} parent=1 // pred_check
      _
    $region15: #{_drop_block_fast_2d_impl.2} parent=1 // pred_check_branch
      %281 = sbr.rel (0) target = $region17
    $region16: #{_drop_block_fast_2d_impl.2} parent=1 // pred_region
      %s283 = ssub.s32 16, 16
      %284 = vsyncadd [#allocation3], %s283
      %s286 = sshll.u32 [#allocation2], 4
      %s287 = int_to_ptr.vmem [resolvable:$true] %s286
      %289 = dma.vmem_to_hbm [thread:$0]  %s287, 16, %s2, [#allocation3]
    $region17: #{_drop_block_fast_2d_impl.2} parent=1 // pred_fallthru
      _
    // Predicated region
    $region18: #{_drop_block_fast_2d_impl.2} parent=1 // pred_check
      _
    $region19: #{_drop_block_fast_2d_impl.2} parent=1 // pred_check_branch
      %291 = sbr.rel (0) target = $region21
    $region20: #{_drop_block_fast_2d_impl.2} parent=1 // pred_region
      %292 = dma.done [#allocation3], 16
    $region21: #{_drop_block_fast_2d_impl.2} parent=1 // pred_fallthru
      _
    %293 = vsyncpa [#allocation3], 1

</llo_original>
